<compile_context>
chip_gen: v7x
topology: tpu7x:2x2x1
jax: 0.10.0
libtpu: 0.0.40
codegen_flags: <defaults>
</compile_context>

<pallas_src>
import functools

import jax
import jax.numpy as jnp
from jax.experimental import pallas as pl
from jax.experimental.pallas import tpu as pltpu

BN_EPS = 1e-3
SE_RATIO = 0.25
LANE = 128
# 48 MiB scoped-VMEM cap: leaves headroom on v7x (64 MiB physical per TC) and
# is far below the 128 MiB on v5e/v6e.
VMEM_LIMIT = 48 * 1024 * 1024
# Depthwise multiply-accumulate dtype: bf16 halves VALU pressure on v6e/v7x.
# Set to jnp.float32 on v5e (no bf16 VPU).
DW_ACC_DTYPE = jnp.bfloat16
# Max rows per matmul tile.  512 keeps double-buffer headroom on v7x; on
# v5e/v6e (128 MiB VMEM) this could be raised to 1024.
MAX_ROW_TILE = 512

# efficientnet-b0 block args: (repeats, kernel, stride, expand, in_ch, out_ch)
BLOCK_ARGS = [
    (1, 3, 1, 1, 32, 16),
    (2, 3, 2, 6, 16, 24),
    (2, 5, 2, 6, 24, 40),
    (3, 3, 2, 6, 40, 80),
    (3, 5, 1, 6, 80, 112),
    (4, 5, 2, 6, 112, 192),
    (1, 3, 1, 6, 192, 320),
]
STEM_CH = 32
HEAD_CH = 1280


def _cpad(c):
    """Pad a channel count up to a multiple of 128 (lane-dense)."""
    return ((c + LANE - 1) // LANE) * LANE


def _pick_tile(n):
    """Largest row tile (multiple of 8, <= MAX_ROW_TILE) dividing n, else n."""
    for t in (1024, 512, 256, 128, 64, 32, 16, 8):
        if t <= MAX_ROW_TILE and n % t == 0:
            return t
    return n


# ----------------------------- Pallas kernels -------------------------------

def _mm_kernel(x_ref, w_ref, b_ref, o_ref, *, act):
    """o = act(x @ w + shift); bf16 MXU operands, f32 accumulate + epilogue."""
    y = jnp.dot(x_ref[...], w_ref[...], preferred_element_type=jnp.float32)
    y = y + b_ref[...]
    if act == "swish":
        y = y * jax.nn.sigmoid(y)
    o_ref[...] = y.astype(o_ref.dtype)


def _proj_kernel(*refs, has_skip):
    """o = [skip +] (x * se_gate) @ w + shift  (fused SE scale + project conv)."""
    it = iter(refs)
    x_ref = next(it)
    s_ref = next(it)
    w_ref = next(it)
    b_ref = next(it)
    skip_ref = next(it) if has_skip else None
    o_ref = next(it)

    x = x_ref[0] * s_ref[0]                      # bf16 SE channel gate (bf16 VALU)
    y = jnp.dot(x, w_ref[...], preferred_element_type=jnp.float32) + b_ref[...]
    if has_skip:
        y = y + skip_ref[0].astype(jnp.float32)  # fused residual add
    o_ref[0] = y.astype(o_ref.dtype)


def _dw_kernel(x_ref, w_ref, b_ref, o_ref, p_ref, *, k, ho, wo, stride):
    """Depthwise conv + BN shift + swish, with fused SE spatial-sum output.

    stride == 1: x_ref block (1, Hp, Wp, ct); taps read shifted ref windows.
    stride == 2: x_ref block (1, 4, Hh, Wh, ct) parity planes (space-to-depth)
                 so every tap reads a contiguous window -> exactly ho*wo MACs
                 per tap (no wasted stride-1 output).
    """
    ct = o_ref.shape[-1]
    acc = jnp.zeros((ho, wo, ct), DW_ACC_DTYPE)
    for i in range(k):
        for j in range(k):
            if stride == 1:
                xt = x_ref[0, i:i + ho, j:j + wo, :]
            else:
                p = 2 * (i % 2) + (j % 2)
                xt = x_ref[0, p, i // 2:i // 2 + ho, j // 2:j // 2 + wo, :]
            wt = w_ref[i:i + 1, j:j + 1, :]
            acc = acc + xt.astype(DW_ACC_DTYPE) * wt.astype(DW_ACC_DTYPE)
    y = acc.astype(jnp.float32) + b_ref[...]     # folded-BN shift (f32 epilogue)
    y = y * jax.nn.sigmoid(y)                    # swish
    o_ref[0] = y.astype(o_ref.dtype)
    # Fused SE squeeze: spatial sum for this (batch, channel-tile) block.
    p_ref[0] = jnp.sum(y.reshape(ho * wo, ct), axis=0, keepdims=True)


def _se_fc_kernel(p_ref, rw_ref, rb_ref, ew_ref, eb_ref, o_ref, *, inv_l):
    """SE excite: mean -> FC + swish -> FC + sigmoid -> per-channel gate."""
    m = (p_ref[0] * inv_l).astype(jnp.bfloat16)                     # (1, C)
    r = jnp.dot(m, rw_ref[...], preferred_element_type=jnp.float32) + rb_ref[...]
    r = r * jax.nn.sigmoid(r)
    e = jnp.dot(r.astype(jnp.bfloat16), ew_ref[...],
                preferred_element_type=jnp.float32) + eb_ref[...]
    o_ref[0] = jax.nn.sigmoid(e).astype(o_ref.dtype)


def _head_kernel(x_ref, wh_ref, bh_ref, wf_ref, bf_ref, o_ref, acc_ref, *, inv_l):
    """Fused head: 1x1 conv + swish + global-avg-pool (MXU ones-matmul) + FC."""
    l = pl.program_id(1)

    @pl.when(l == 0)
    def _():
        acc_ref[...] = jnp.zeros_like(acc_ref)

    y = jnp.dot(x_ref[0], wh_ref[...], preferred_element_type=jnp.float32)
    y = y + bh_ref[...]
    y = y * jax.nn.sigmoid(y)                                       # swish
    # GAP on the MXU (ones-row matmul) instead of a cross-sublane XLU reduce.
    ones = jnp.ones((1, y.shape[0]), jnp.bfloat16)
    acc_ref[...] += jnp.dot(ones, y.astype(jnp.bfloat16),
                            preferred_element_type=jnp.float32)

    @pl.when(l == pl.num_programs(1) - 1)
    def _():
        m = (acc_ref[...] * inv_l).astype(jnp.bfloat16)             # (1, 1280)
        o_ref[0] = jnp.dot(m, wf_ref[...],
                           preferred_element_type=jnp.float32) + bf_ref[...]


# ----------------------------- kernel wrappers ------------------------------

def matmul_flat(x, w, shift, act="none"):
    """x:(M,K) bf16 (batch+rows flattened), w:(K,N) bf16, shift:(N,) f32."""
    M, K = x.shape
    N = w.shape[1]
    tm = _pick_tile(M)
    return pl.pallas_call(
        functools.partial(_mm_kernel, act=act),
        out_shape=jax.ShapeDtypeStruct((M, N), jnp.bfloat16),
        grid=(M // tm,),
        in_specs=[pl.BlockSpec((tm, K), lambda m: (m, 0)),
                  pl.BlockSpec((K, N), lambda m: (0, 0)),
                  pl.BlockSpec((1, N), lambda m: (0, 0))],
        out_specs=pl.BlockSpec((tm, N), lambda m: (m, 0)),
        compiler_params=pltpu.CompilerParams(
            dimension_semantics=("parallel",),
            vmem_limit_bytes=VMEM_LIMIT),
    )(x, w, shift.reshape(1, N))


def proj_matmul(x3, gate, w, shift, skip=None):
    """Fused SE-scale + project 1x1 conv (+ residual).

    x3:(B,L,K) bf16, gate:(B,1,K) bf16 (per-batch), w:(K,N) bf16,
    shift:(N,) f32, skip:(B,L,N) bf16.
    """
    B, L, K = x3.shape
    N = w.shape[1]
    tl = _pick_tile(L)

    in_specs = [pl.BlockSpec((1, tl, K), lambda b, l: (b, l, 0)),
                pl.BlockSpec((1, 1, K), lambda b, l: (b, 0, 0)),
                pl.BlockSpec((K, N), lambda b, l: (0, 0)),
                pl.BlockSpec((1, N), lambda b, l: (0, 0))]
    args = [x3, gate, w, shift.reshape(1, N)]
    if skip is not None:
        in_specs.append(pl.BlockSpec((1, tl, N), lambda b, l: (b, l, 0)))
        args.append(skip)

    return pl.pallas_call(
        functools.partial(_proj_kernel, has_skip=skip is not None),
        out_shape=jax.ShapeDtypeStruct((B, L, N), jnp.bfloat16),
        grid=(B, L // tl),
        in_specs=in_specs,
        out_specs=pl.BlockSpec((1, tl, N), lambda b, l: (b, l, 0)),
        compiler_params=pltpu.CompilerParams(
            dimension_semantics=("parallel", "parallel"),
            vmem_limit_bytes=VMEM_LIMIT),
    )(*args)


def _dw_call(x_in, w, shift, ho, wo, stride):
    B = x_in.shape[0]
    k = w.shape[0]
    C = w.shape[-1]
    ct = LANE
    if stride == 1:
        _, Hp, Wp, _ = x_in.shape
        x_spec = pl.BlockSpec((1, Hp, Wp, ct), lambda b, c: (b, 0, 0, c))
    else:
        _, _, Hh, Wh, _ = x_in.shape
        x_spec = pl.BlockSpec((1, 4, Hh, Wh, ct), lambda b, c: (b, 0, 0, 0, c))
    return pl.pallas_call(
        functools.partial(_dw_kernel, k=k, ho=ho, wo=wo, stride=stride),
        out_shape=(jax.ShapeDtypeStruct((B, ho, wo, C), jnp.bfloat16),
                   jax.ShapeDtypeStruct((B, 1, C), jnp.float32)),
        grid=(B, C // ct),
        in_specs=[x_spec,
                  pl.BlockSpec((k, k, ct), lambda b, c: (0, 0, c)),
                  pl.BlockSpec((1, 1, ct), lambda b, c: (0, 0, c))],
        out_specs=(pl.BlockSpec((1, ho, wo, ct), lambda b, c: (b, 0, 0, c)),
                   pl.BlockSpec((1, 1, ct), lambda b, c: (b, 0, c))),
        compiler_params=pltpu.CompilerParams(
            dimension_semantics=("parallel", "parallel"),
            vmem_limit_bytes=VMEM_LIMIT),
    )(x_in, w, shift.reshape(1, 1, C))


def se_fc(pooled, rw, rb, ew, eb, hw):
    """pooled:(B,1,C) f32 spatial sums -> gate (B,1,C) bf16."""
    B, _, C = pooled.shape
    sec = rw.shape[1]
    return pl.pallas_call(
        functools.partial(_se_fc_kernel, inv_l=1.0 / hw),
        out_shape=jax.ShapeDtypeStruct((B, 1, C), jnp.bfloat16),
        grid=(B,),
        in_specs=[pl.BlockSpec((1, 1, C), lambda b: (b, 0, 0)),
                  pl.BlockSpec((C, sec), lambda b: (0, 0)),
                  pl.BlockSpec((1, sec), lambda b: (0, 0)),
                  pl.BlockSpec((sec, C), lambda b: (0, 0)),
                  pl.BlockSpec((1, C), lambda b: (0, 0))],
        out_specs=pl.BlockSpec((1, 1, C), lambda b: (b, 0, 0)),
        compiler_params=pltpu.CompilerParams(
            dimension_semantics=("parallel",),
            vmem_limit_bytes=VMEM_LIMIT),
    )(pooled, rw, rb.reshape(1, sec), ew, eb.reshape(1, C))


def head_forward(xf, wh, bh, wf, bf):
    """xf:(B,L,C) bf16 -> padded logits (B,1,Ncls_pad) f32 (conv+swish+GAP+FC)."""
    B, L, C = xf.shape
    Nh = wh.shape[1]
    Nc = wf.shape[1]
    tl = _pick_tile(L)
    return pl.pallas_call(
        functools.partial(_head_kernel, inv_l=1.0 / L),
        out_shape=jax.ShapeDtypeStruct((B, 1, Nc), jnp.float32),
        grid=(B, L // tl),
        in_specs=[
            pl.BlockSpec((1, tl, C), lambda b, l: (b, l, 0)),
            pl.BlockSpec((C, Nh), lambda b, l: (0, 0)),
            pl.BlockSpec((1, Nh), lambda b, l: (0, 0)),
            pl.BlockSpec((Nh, Nc), lambda b, l: (0, 0)),
            pl.BlockSpec((1, Nc), lambda b, l: (0, 0)),
        ],
        out_specs=pl.BlockSpec((1, 1, Nc), lambda b, l: (b, 0, 0)),
        scratch_shapes=[pltpu.VMEM((1, Nh), jnp.float32)],
        compiler_params=pltpu.CompilerParams(
            dimension_semantics=("parallel", "arbitrary"),
            vmem_limit_bytes=VMEM_LIMIT),
    )(xf, wh, bh.reshape(1, Nh), wf, bf.reshape(1, Nc))


# ----------------------------- JAX glue --------------------------------------

def tf_same_pad(x, k, s):
    """TF 'SAME' static padding (Conv2dStaticSamePadding)."""
    _, H, W, _ = x.shape

    def pads(n):
        out = -(-n // s)
        total = max((out - 1) * s + k - n, 0)
        return out, total // 2, total - total // 2

    Ho, pt, pb = pads(H)
    Wo, pleft, pright = pads(W)
    xp = jnp.pad(x, ((0, 0), (pt, pb), (pleft, pright), (0, 0)))
    return xp, Ho, Wo


def stem_conv(x, w, shift):
    """3x3/s2 stem conv + folded BN + swish.  XLA im2col (K padded to 32) + matmul."""
    k, stride = 3, 2
    xp, Ho, Wo = tf_same_pad(x, k, stride)
    B = x.shape[0]
    cols = [xp[:, i:i + (Ho - 1) * stride + 1:stride,
               j:j + (Wo - 1) * stride + 1:stride, :]
            for i in range(k) for j in range(k)]
    patches = jnp.concatenate(cols, axis=-1)                       # (B,Ho,Wo,27)
    patches = jnp.pad(patches, ((0, 0), (0, 0), (0, 0), (0, 32 - 27)))
    y = matmul_flat(patches.reshape(B * Ho * Wo, 32), w, shift, act="swish")
    return y.reshape(B, Ho, Wo, w.shape[1])


def depthwise(x, w, shift, stride):
    """TF-SAME depthwise conv + BN + swish; returns (y, spatial-sum for SE)."""
    k = w.shape[0]
    xp, Ho, Wo = tf_same_pad(x, k, stride)
    if stride == 1:
        return _dw_call(xp, w, shift, Ho, Wo, 1)
    # stride 2: rearrange into 2x2 parity planes so every tap reads a
    # contiguous window (no wasted stride-1 output, no strided loads).
    B, Hp, Wp, C = xp.shape
    Hh, Wh = (Hp + 1) // 2, (Wp + 1) // 2
    xp = jnp.pad(xp, ((0, 0), (0, 2 * Hh - Hp), (0, 2 * Wh - Wp), (0, 0)))
    xq = (xp.reshape(B, Hh, 2, Wh, 2, C)
            .transpose(0, 2, 4, 1, 3, 5)
            .reshape(B, 4, Hh, Wh, C))
    return _dw_call(xq, w, shift, Ho, Wo, 2)


# ----------------------------- parameters ------------------------------------

class KeyGen:
    def __init__(self, key):
        self.key = key

    def __call__(self):
        self.key, k = jax.random.split(self.key)
        return k


def _normal(kg, shape, std=0.05):
    return jax.random.normal(kg(), shape, jnp.float32) * std


def _init_bn(c):
    return {"gamma": jnp.ones((c,), jnp.float32),
            "beta": jnp.zeros((c,), jnp.float32),
            "mean": jnp.zeros((c,), jnp.float32),
            "var": jnp.ones((c,), jnp.float32)}


def _bn_fold(bn):
    scale = bn["gamma"] / jnp.sqrt(bn["var"] + BN_EPS)
    shift = bn["beta"] - bn["mean"] * scale
    return scale, shift


def _pad_mat(w, kp, np_):
    k, n = w.shape
    return jnp.zeros((kp, np_), jnp.float32).at[:k, :n].set(w).astype(jnp.bfloat16)


def _pad_vec(v, np_):
    return jnp.zeros((np_,), jnp.float32).at[:v.shape[0]].set(v)


def build_params(num_classes, key):
    """BN-folded, channel-padded, bf16 weights (eval mode)."""
    kg = KeyGen(key)
    p = {"num_classes": num_classes, "blocks": []}

    stem_w = _normal(kg, (3, 3, 3, STEM_CH))
    sc, sh = _bn_fold(_init_bn(STEM_CH))
    p["stem_w"] = _pad_mat((stem_w * sc).reshape(27, STEM_CH), 32, _cpad(STEM_CH))
    p["stem_shift"] = _pad_vec(sh, _cpad(STEM_CH))

    for (rep, k, s, e, cin0, cout0) in BLOCK_ARGS:
        for r in range(rep):
            cin = cin0 if r == 0 else cout0
            stride = s if r == 0 else 1
            mid = cin * e
            sec = max(1, int(cin * SE_RATIO))
            cin_p, mid_p, cout_p, sec_p = _cpad(cin), _cpad(mid), _cpad(cout0), _cpad(sec)
            blk = {"k": k, "stride": stride, "expand": e, "cin": cin, "cout": cout0,
                   "mid_p": mid_p, "cout_p": cout_p}

            if e != 1:
                w = _normal(kg, (cin, mid))
                sc, sh = _bn_fold(_init_bn(mid))
                blk["expand_w"] = _pad_mat(w * sc, cin_p, mid_p)
                blk["expand_shift"] = _pad_vec(sh, mid_p)

            w = _normal(kg, (k, k, mid))
            sc, sh = _bn_fold(_init_bn(mid))
            blk["dw_w"] = (jnp.zeros((k, k, mid_p), jnp.float32)
                           .at[:, :, :mid].set(w * sc).astype(jnp.bfloat16))
            blk["dw_shift"] = _pad_vec(sh, mid_p)

            blk["se_rw"] = _pad_mat(_normal(kg, (mid, sec)), mid_p, sec_p)
            blk["se_rb"] = _pad_vec(jnp.zeros((sec,), jnp.float32), sec_p)
            blk["se_ew"] = _pad_mat(_normal(kg, (sec, mid)), sec_p, mid_p)
            blk["se_eb"] = _pad_vec(jnp.zeros((mid,), jnp.float32), mid_p)

            w = _normal(kg, (mid, cout0))
            sc, sh = _bn_fold(_init_bn(cout0))
            blk["proj_w"] = _pad_mat(w * sc, mid_p, cout_p)
            blk["proj_shift"] = _pad_vec(sh, cout_p)

            p["blocks"].append(blk)

    cin = BLOCK_ARGS[-1][5]
    w = _normal(kg, (cin, HEAD_CH))
    sc, sh = _bn_fold(_init_bn(HEAD_CH))
    p["head_w"] = _pad_mat(w * sc, _cpad(cin), HEAD_CH)
    p["head_shift"] = _pad_vec(sh, HEAD_CH)
    p["fc_w"] = _pad_mat(_normal(kg, (HEAD_CH, num_classes)), HEAD_CH, _cpad(num_classes))
    p["fc_b"] = _pad_vec(jnp.zeros((num_classes,), jnp.float32), _cpad(num_classes))
    return p


# ----------------------------- forward ----------------------------------------

def efficientnet_forward(params, x_nchw):
    x = jnp.transpose(x_nchw, (0, 2, 3, 1)).astype(jnp.bfloat16)   # NCHW -> NHWC

    # stem: conv3x3 s2 + folded BN + swish
    x = stem_conv(x, params["stem_w"], params["stem_shift"])

    # MBConv blocks
    for blk in params["blocks"]:
        use_skip = blk["stride"] == 1 and blk["cin"] == blk["cout"]
        skip = x if use_skip else None
        B, H, W, Cp = x.shape

        if blk["expand"] != 1:
            # 1x1 expand conv: batch+rows flattened into one M axis.
            y = matmul_flat(x.reshape(B * H * W, Cp),
                            blk["expand_w"], blk["expand_shift"], act="swish")
            x = y.reshape(B, H, W, blk["mid_p"])

        # depthwise conv (+BN+swish) with fused SE spatial-sum output
        x, pooled = depthwise(x, blk["dw_w"], blk["dw_shift"], blk["stride"])
        B, H, W, Cm = x.shape

        # SE excite FCs (tiny): mean -> FC+swish -> FC+sigmoid -> gate
        gate = se_fc(pooled, blk["se_rw"], blk["se_rb"],
                     blk["se_ew"], blk["se_eb"], H * W)

        # fused: SE channel-scale + project 1x1 conv + BN shift + residual add
        skip3 = skip.reshape(B, H * W, blk["cout_p"]) if use_skip else None
        x = proj_matmul(x.reshape(B, H * W, Cm), gate,
                        blk["proj_w"], blk["proj_shift"], skip=skip3)
        x = x.reshape(B, H, W, blk["cout_p"])

    # fused head: conv1x1 + BN + swish + global avg pool + (dropout=id) + FC
    B, H, W, Cp = x.shape
    logits_p = head_forward(x.reshape(B, H * W, Cp),
                            params["head_w"], params["head_shift"],
                            params["fc_w"], params["fc_b"])
    return logits_p[:, 0, :params["num_classes"]]


# ----------------------------- main --------------------------------------------

if __name__ == "__main__":
    num_classes = 10
    key = jax.random.PRNGKey(0)
    kp, kx = jax.random.split(key)

    params = build_params(num_classes, kp)
    x = jax.random.normal(kx, (2, 3, 32, 32), jnp.float32)  # NCHW like PyTorch

    out = jax.block_until_ready(efficientnet_forward(params, x))

    assert out.shape == (2, num_classes), out.shape
    assert bool(jnp.all(jnp.isfinite(out))), "non-finite output"
    print("KERNEL_OK")
</pallas_src>

<mosaic_0001>
module attributes {stable_mosaic.version = 11 : i64} {
  func.func @_mm_kernel(%arg0: i32, %arg1: memref<512x32xbf16, #tpu.memory_space<vmem>>, %arg2: memref<32x128xbf16, #tpu.memory_space<vmem>>, %arg3: memref<1x128xf32, #tpu.memory_space<vmem>>, %arg4: memref<512x128xbf16, #tpu.memory_space<vmem>>) attributes {dimension_semantics = [#tpu.dimension_semantics<parallel>], iteration_bounds = array<i64: 1>, scalar_prefetch = 0 : i64, scratch_operands = 0 : i64, tpu.core_type = #tpu.core_type<tc>, window_params = [{transform_indices = @transform_0, window_bounds = array<i64: 512, 32>}, {pipeline_mode = #tpu.pipeline_mode<synchronous>, transform_indices = @transform_1, window_bounds = array<i64: 32, 128>}, {pipeline_mode = #tpu.pipeline_mode<synchronous>, transform_indices = @transform_2, window_bounds = array<i64: 1, 128>}, {transform_indices = @transform_3, window_bounds = array<i64: 512, 128>}]} {
    %c0 = arith.constant 0 : index
    %c0_0 = arith.constant 0 : index
    %0 = vector.load %arg1[%c0, %c0_0] : memref<512x32xbf16, #tpu.memory_space<vmem>>, vector<512x32xbf16>
    %c0_1 = arith.constant 0 : index
    %c0_2 = arith.constant 0 : index
    %1 = vector.load %arg2[%c0_1, %c0_2] : memref<32x128xbf16, #tpu.memory_space<vmem>>, vector<32x128xbf16>
    %cst = arith.constant dense<0.000000e+00> : vector<512x128xf32>
    %2 = tpu.matmul %0, %1, %cst {dimension_numbers = #tpu.dot_dimension_numbers<[1], [0], [0], [1], [0, 0, 1, 1], [], []>} : vector<512x32xbf16>, vector<32x128xbf16>, vector<512x128xf32> -> vector<512x128xf32>
    %c0_3 = arith.constant 0 : index
    %c0_4 = arith.constant 0 : index
    %3 = vector.load %arg3[%c0_3, %c0_4] : memref<1x128xf32, #tpu.memory_space<vmem>>, vector<1x128xf32>
    %4 = vector.broadcast %3 : vector<1x128xf32> to vector<512x128xf32>
    %5 = arith.addf %2, %4 : vector<512x128xf32>
    %6 = arith.negf %5 : vector<512x128xf32>
    %7 = math.exp %6 : vector<512x128xf32>
    %cst_5 = arith.constant 1.000000e+00 : f32
    %8 = vector.broadcast %cst_5 : f32 to vector<512x128xf32>
    %9 = arith.addf %8, %7 : vector<512x128xf32>
    %10 = arith.divf %8, %9 : vector<512x128xf32>
    %11 = arith.mulf %5, %10 : vector<512x128xf32>
    %12 = arith.truncf %11 : vector<512x128xf32> to vector<512x128xbf16>
    %c0_6 = arith.constant 0 : index
    %c0_7 = arith.constant 0 : index
    %13 = vector.load %arg4[%c0_6, %c0_7] : memref<512x128xbf16, #tpu.memory_space<vmem>>, vector<512x128xbf16>
    tpu.vector_store %arg4[%c0_6, %c0_7], %12 {strides = array<i32>} : memref<512x128xbf16, #tpu.memory_space<vmem>>, vector<512x128xbf16>,
    return
  }
  func.func @transform_0(%arg0: i32) -> (i32, i32) {
    %c0_i32 = arith.constant 0 : i32
    %c0_i32_0 = arith.constant 0 : i32
    return %arg0, %c0_i32 : i32, i32
  }
  func.func @transform_1(%arg0: i32) -> (i32, i32) {
    %c0_i32 = arith.constant 0 : i32
    %c0_i32_0 = arith.constant 0 : i32
    %c0_i32_1 = arith.constant 0 : i32
    return %c0_i32, %c0_i32_0 : i32, i32
  }
  func.func @transform_2(%arg0: i32) -> (i32, i32) {
    %c0_i32 = arith.constant 0 : i32
    %c0_i32_0 = arith.constant 0 : i32
    %c0_i32_1 = arith.constant 0 : i32
    return %c0_i32, %c0_i32_0 : i32, i32
  }
  func.func @transform_3(%arg0: i32) -> (i32, i32) {
    %c0_i32 = arith.constant 0 : i32
    %c0_i32_0 = arith.constant 0 : i32
    return %arg0, %c0_i32 : i32, i32
  }
}

</mosaic_0001>

<llo_original>
// kernel: tpu_custom_call.1
$region0: #{tpu_custom_call.1}
  #allocation0 [shape = 'u32[]', space=smem, size = 0x4, offset = 0x4, fixed_abs, tag = 'smem constant byte address 0x4 - core index']
  #allocation1 [shape = 'u32[144,128]{1,0:T(1,128)}', space=vmem, size = 0x12000, scoped, tag = 'internal scratch']
  %s0 = inlined_call_operand.vmem [shape: bf16[512,32], index: 0, kind: input, shape index: {}]
  %s1 = inlined_call_operand.vmem [shape: bf16[32,128], index: 1, kind: input, shape index: {}]
  %s2 = inlined_call_operand.vmem [shape: f32[1,128], index: 2, kind: input, shape index: {}]
  %s3 = inlined_call_operand.hbm [shape: bf16[512,128], index: 3, kind: output, shape index: {}]
  %s4 = sld [smem:[#allocation0]]
  $region22: #{tpu_custom_call.1} parent=0
    _
  %s6 = ssub.s32 1, %s4
  %s7 = scalar_select 0, %s6, %s4
  $region1: #{tpu_custom_call.1} parent=0
    #allocation2 [shape = 'u8[131072]{0}', space=vmem, size = 0x20000, scoped, tag = 'output window, operand 0, single buffered']
    #allocation3 [shape = 's32[1]{0}', space=sflag, size = 0x4, scoped, tag = 'scoped memory for tpu_custom_call.1']
    %8 = vsyncpa [#allocation3], 0
    // Predicated region
    $region2: #{tpu_custom_call.1} parent=1 // pred_check
      _
    $region3: #{tpu_custom_call.1} parent=1 // pred_check_branch
      %10 = sbr.rel (0) target = $region5
    $region4: #{tpu_custom_call.1} parent=1 // pred_region
      _
    $region5: #{tpu_custom_call.1} parent=1 // pred_fallthru
      _
    // Predicated region
    $region6: #{tpu_custom_call.1} parent=1 // pred_check
      _
    $region7: #{tpu_custom_call.1} parent=1 // pred_check_branch
      %12 = sbr.rel (0) target = $region9
    $region8: #{tpu_custom_call.1} parent=1 // pred_region
      _
    $region9: #{tpu_custom_call.1} parent=1 // pred_fallthru
      _
    // Predicated region
    $region10: #{tpu_custom_call.1} parent=1 // pred_check
      _
    $region11: #{tpu_custom_call.1} parent=1 // pred_check_branch
      %14 = sbr.rel (0) target = $region13
    $region12: #{tpu_custom_call.1} parent=1 // pred_region
      _
    $region13: #{tpu_custom_call.1} parent=1 // pred_fallthru
      _
    %v16 = vld [vmem:[%s0] sm:$0xf]
    %v17 = vld [vmem:[%s0 + $0x4] sm:$0xf]
    %v18 = vld [vmem:[%s0 + $0x8] sm:$0xf]
    %v19 = vld [vmem:[%s0 + $0xc] sm:$0xf]
    %v20 = vld [vmem:[%s0 + $0x10] sm:$0xf]
    %v21 = vld [vmem:[%s0 + $0x14] sm:$0xf]
    %v22 = vld [vmem:[%s0 + $0x18] sm:$0xf]
    %v23 = vld [vmem:[%s0 + $0x1c] sm:$0xf]
    %v24 = vld [vmem:[%s0 + $0x20] sm:$0xf]
    %v25 = vld [vmem:[%s0 + $0x24] sm:$0xf]
    %v26 = vld [vmem:[%s0 + $0x28] sm:$0xf]
    %v27 = vld [vmem:[%s0 + $0x2c] sm:$0xf]
    %v28 = vld [vmem:[%s0 + $0x30] sm:$0xf]
    %v29 = vld [vmem:[%s0 + $0x34] sm:$0xf]
    %v30 = vld [vmem:[%s0 + $0x38] sm:$0xf]
    %v31 = vld [vmem:[%s0 + $0x3c] sm:$0xf]
    %v32 = vld [vmem:[%s0 + $0x40] sm:$0xf]
    %v33 = vld [vmem:[%s0 + $0x44] sm:$0xf]
    %v34 = vld [vmem:[%s0 + $0x48] sm:$0xf]
    %v35 = vld [vmem:[%s0 + $0x4c] sm:$0xf]
    %v36 = vld [vmem:[%s0 + $0x50] sm:$0xf]
    %v37 = vld [vmem:[%s0 + $0x54] sm:$0xf]
    %v38 = vld [vmem:[%s0 + $0x58] sm:$0xf]
    %v39 = vld [vmem:[%s0 + $0x5c] sm:$0xf]
    %v40 = vld [vmem:[%s0 + $0x60] sm:$0xf]
    %v41 = vld [vmem:[%s0 + $0x64] sm:$0xf]
    %v42 = vld [vmem:[%s0 + $0x68] sm:$0xf]
    %v43 = vld [vmem:[%s0 + $0x6c] sm:$0xf]
    %v44 = vld [vmem:[%s0 + $0x70] sm:$0xf]
    %v45 = vld [vmem:[%s0 + $0x74] sm:$0xf]
    %v46 = vld [vmem:[%s0 + $0x78] sm:$0xf]
    %v47 = vld [vmem:[%s0 + $0x7c] sm:$0xf]
    %v48 = vld [vmem:[%s0 + $0x80] sm:$0xf]
    %v49 = vld [vmem:[%s0 + $0x84] sm:$0xf]
    %v50 = vld [vmem:[%s0 + $0x88] sm:$0xf]
    %v51 = vld [vmem:[%s0 + $0x8c] sm:$0xf]
    %v52 = vld [vmem:[%s0 + $0x90] sm:$0xf]
    %v53 = vld [vmem:[%s0 + $0x94] sm:$0xf]
    %v54 = vld [vmem:[%s0 + $0x98] sm:$0xf]
    %v55 = vld [vmem:[%s0 + $0x9c] sm:$0xf]
    %v56 = vld [vmem:[%s0 + $0xa0] sm:$0xf]
    %v57 = vld [vmem:[%s0 + $0xa4] sm:$0xf]
    %v58 = vld [vmem:[%s0 + $0xa8] sm:$0xf]
    %v59 = vld [vmem:[%s0 + $0xac] sm:$0xf]
    %v60 = vld [vmem:[%s0 + $0xb0] sm:$0xf]
    %v61 = vld [vmem:[%s0 + $0xb4] sm:$0xf]
    %v62 = vld [vmem:[%s0 + $0xb8] sm:$0xf]
    %v63 = vld [vmem:[%s0 + $0xbc] sm:$0xf]
    %v64 = vld [vmem:[%s0 + $0xc0] sm:$0xf]
    %v65 = vld [vmem:[%s0 + $0xc4] sm:$0xf]
    %v66 = vld [vmem:[%s0 + $0xc8] sm:$0xf]
    %v67 = vld [vmem:[%s0 + $0xcc] sm:$0xf]
    %v68 = vld [vmem:[%s0 + $0xd0] sm:$0xf]
    %v69 = vld [vmem:[%s0 + $0xd4] sm:$0xf]
    %v70 = vld [vmem:[%s0 + $0xd8] sm:$0xf]
    %v71 = vld [vmem:[%s0 + $0xdc] sm:$0xf]
    %v72 = vld [vmem:[%s0 + $0xe0] sm:$0xf]
    %v73 = vld [vmem:[%s0 + $0xe4] sm:$0xf]
    %v74 = vld [vmem:[%s0 + $0xe8] sm:$0xf]
    %v75 = vld [vmem:[%s0 + $0xec] sm:$0xf]
    %v76 = vld [vmem:[%s0 + $0xf0] sm:$0xf]
    %v77 = vld [vmem:[%s0 + $0xf4] sm:$0xf]
    %v78 = vld [vmem:[%s0 + $0xf8] sm:$0xf]
    %v79 = vld [vmem:[%s0 + $0xfc] sm:$0xf]
    %v80 = vld [vmem:[%s1] sm:$0xf]
    %v81 = vld [vmem:[%s1 + $0x4] sm:$0xf]
    %v82 = vld [vmem:[%s1 + $0x8] sm:$0xf]
    %v83 = vld [vmem:[%s1 + $0xc] sm:$0xf]
    %v84 = vld [vmem:[%s2] sm:$0x1]
    %v86 = vlaneseq
    %v87 = vshrl.u32 %v86, 7
    %v88 = vsub.s32 0, %v87
    %v89 = vrot.slane %v84, %v88
    %v155 = vunpack.c.l.b16 %v16
    %v156 = vunpack.c.l.b16 %v17
    %v157 = vunpack.c.l.b16 %v18
    %v158 = vunpack.c.l.b16 %v19
    %v159 = vunpack.c.l.b16 %v20
    %v160 = vunpack.c.l.b16 %v21
    %v161 = vunpack.c.l.b16 %v22
    %v162 = vunpack.c.l.b16 %v23
    %v163 = vunpack.c.l.b16 %v24
    %v164 = vunpack.c.l.b16 %v25
    %v165 = vunpack.c.l.b16 %v26
    %v166 = vunpack.c.l.b16 %v27
    %v167 = vunpack.c.l.b16 %v28
    %v168 = vunpack.c.l.b16 %v29
    %v169 = vunpack.c.l.b16 %v30
    %v170 = vunpack.c.l.b16 %v31
    %v171 = vunpack.c.l.b16 %v32
    %v172 = vunpack.c.l.b16 %v33
    %v173 = vunpack.c.l.b16 %v34
    %v174 = vunpack.c.l.b16 %v35
    %v175 = vunpack.c.l.b16 %v36
    %v176 = vunpack.c.l.b16 %v37
    %v177 = vunpack.c.l.b16 %v38
    %v178 = vunpack.c.l.b16 %v39
    %v179 = vunpack.c.l.b16 %v40
    %v180 = vunpack.c.l.b16 %v41
    %v181 = vunpack.c.l.b16 %v42
    %v182 = vunpack.c.l.b16 %v43
    %v183 = vunpack.c.l.b16 %v44
    %v184 = vunpack.c.l.b16 %v45
    %v185 = vunpack.c.l.b16 %v46
    %v186 = vunpack.c.l.b16 %v47
    %v187 = vunpack.c.l.b16 %v48
    %v188 = vunpack.c.l.b16 %v49
    %v189 = vunpack.c.l.b16 %v50
    %v190 = vunpack.c.l.b16 %v51
    %v191 = vunpack.c.l.b16 %v52
    %v192 = vunpack.c.l.b16 %v53
    %v193 = vunpack.c.l.b16 %v54
    %v194 = vunpack.c.l.b16 %v55
    %v195 = vunpack.c.l.b16 %v56
    %v196 = vunpack.c.l.b16 %v57
    %v197 = vunpack.c.l.b16 %v58
    %v198 = vunpack.c.l.b16 %v59
    %v199 = vunpack.c.l.b16 %v60
    %v200 = vunpack.c.l.b16 %v61
    %v201 = vunpack.c.l.b16 %v62
    %v202 = vunpack.c.l.b16 %v63
    %v203 = vunpack.c.l.b16 %v64
    %v204 = vunpack.c.l.b16 %v65
    %v205 = vunpack.c.l.b16 %v66
    %v206 = vunpack.c.l.b16 %v67
    %v207 = vunpack.c.l.b16 %v68
    %v208 = vunpack.c.l.b16 %v69
    %v209 = vunpack.c.l.b16 %v70
    %v210 = vunpack.c.l.b16 %v71
    %v211 = vunpack.c.l.b16 %v72
    %v212 = vunpack.c.l.b16 %v73
    %v213 = vunpack.c.l.b16 %v74
    %v214 = vunpack.c.l.b16 %v75
    %v215 = vunpack.c.l.b16 %v76
    %v216 = vunpack.c.l.b16 %v77
    %v217 = vunpack.c.l.b16 %v78
    %v218 = vunpack.c.l.b16 %v79
    %v219 = vpack.c.b16 %v156, %v155
    %v220 = vpack.c.b16 %v158, %v157
    %v221 = vpack.c.b16 %v160, %v159
    %v222 = vpack.c.b16 %v162, %v161
    %v223 = vpack.c.b16 %v164, %v163
    %v224 = vpack.c.b16 %v166, %v165
    %v225 = vpack.c.b16 %v168, %v167
    %v226 = vpack.c.b16 %v170, %v169
    %v227 = vpack.c.b16 %v172, %v171
    %v228 = vpack.c.b16 %v174, %v173
    %v229 = vpack.c.b16 %v176, %v175
    %v230 = vpack.c.b16 %v178, %v177
    %v231 = vpack.c.b16 %v180, %v179
    %v232 = vpack.c.b16 %v182, %v181
    %v233 = vpack.c.b16 %v184, %v183
    %v234 = vpack.c.b16 %v186, %v185
    %v235 = vpack.c.b16 %v188, %v187
    %v236 = vpack.c.b16 %v190, %v189
    %v237 = vpack.c.b16 %v192, %v191
    %v238 = vpack.c.b16 %v194, %v193
    %v239 = vpack.c.b16 %v196, %v195
    %v240 = vpack.c.b16 %v198, %v197
    %v241 = vpack.c.b16 %v200, %v199
    %v242 = vpack.c.b16 %v202, %v201
    %v243 = vpack.c.b16 %v204, %v203
    %v244 = vpack.c.b16 %v206, %v205
    %v245 = vpack.c.b16 %v208, %v207
    %v246 = vpack.c.b16 %v210, %v209
    %v247 = vpack.c.b16 %v212, %v211
    %v248 = vpack.c.b16 %v214, %v213
    %v249 = vpack.c.b16 %v216, %v215
    %v250 = vpack.c.b16 %v218, %v217
    %v255 = vunpack.c.l.b16 %v80
    %v256 = vunpack.c.l.b16 %v81
    %v257 = vunpack.c.l.b16 %v82
    %v258 = vunpack.c.l.b16 %v83
    %v259 = vpack.c.b16 %v256, %v255
    %v260 = vpack.c.b16 %v258, %v257
    %vm263 = vcmask 261120
    %v265 = vsel %vm263, %v219, 0
    %v268 = vsel %vm263, %v220, 0
    %v271 = vsel %vm263, %v221, 0
    %v274 = vsel %vm263, %v222, 0
    %v277 = vsel %vm263, %v223, 0
    %v280 = vsel %vm263, %v224, 0
    %v283 = vsel %vm263, %v225, 0
    %v286 = vsel %vm263, %v226, 0
    %v289 = vsel %vm263, %v227, 0
    %v292 = vsel %vm263, %v228, 0
    %v295 = vsel %vm263, %v229, 0
    %v298 = vsel %vm263, %v230, 0
    %v301 = vsel %vm263, %v231, 0
    %v304 = vsel %vm263, %v232, 0
    %v307 = vsel %vm263, %v233, 0
    %v310 = vsel %vm263, %v234, 0
    %v313 = vsel %vm263, %v235, 0
    %v316 = vsel %vm263, %v236, 0
    %v319 = vsel %vm263, %v237, 0
    %v322 = vsel %vm263, %v238, 0
    %v325 = vsel %vm263, %v239, 0
    %v328 = vsel %vm263, %v240, 0
    %v331 = vsel %vm263, %v241, 0
    %v334 = vsel %vm263, %v242, 0
    %v337 = vsel %vm263, %v243, 0
    %v340 = vsel %vm263, %v244, 0
    %v343 = vsel %vm263, %v245, 0
    %v346 = vsel %vm263, %v246, 0
    %v349 = vsel %vm263, %v247, 0
    %v352 = vsel %vm263, %v248, 0
    %v355 = vsel %vm263, %v249, 0
    %v358 = vsel %vm263, %v250, 0
    %360 = vmatprep.subr.bf16.mxu0 0
    %361 = vmatpush1.bf16.msra.mxu0 %v259
    %362 = vmatprep.subr.bf16.mxu0 0
    %363 = vmatpush1.bf16.msra.mxu0 %v260
    %364 = vmatprep.subr.bf16.mxu0 0
    %365 = vmatpush1.bf16.msra.mxu0 0
    %366 = vmatprep.subr.bf16.mxu0 0
    %367 = vmatpush1.bf16.msra.mxu0 0
    %368 = vmatprep.subr.bf16.mxu0 0
    %369 = vmatpush1.bf16.msra.mxu0 0
    %370 = vmatprep.subr.bf16.mxu0 0
    %371 = vmatpush1.bf16.msra.mxu0 0
    %372 = vmatprep.subr.bf16.mxu0 0
    %373 = vmatpush1.bf16.msra.mxu0 0
    %374 = vmatprep.subr.bf16.mxu0 0
    %375 = vmatpush1.bf16.msra.mxu0 0
    %376 = vmatprep.subr.bf16.mxu0 0
    %377 = vmatpush1.bf16.msra.mxu0 0
    %378 = vmatprep.subr.bf16.mxu0 0
    %379 = vmatpush1.bf16.msra.mxu0 0
    %380 = vmatprep.subr.bf16.mxu0 0
    %381 = vmatpush1.bf16.msra.mxu0 0
    %382 = vmatprep.subr.bf16.mxu0 0
    %383 = vmatpush1.bf16.msra.mxu0 0
    %384 = vmatprep.subr.bf16.mxu0 0
    %385 = vmatpush1.bf16.msra.mxu0 0
    %386 = vmatprep.subr.bf16.mxu0 0
    %387 = vmatpush1.bf16.msra.mxu0 0
    %388 = vmatprep.subr.bf16.mxu0 0
    %389 = vmatpush1.bf16.msra.mxu0 0
    %390 = vmatprep.subr.bf16.mxu0 0
    %391 = vmatpush1.bf16.msra.mxu0 0
    %392 = vmatprep.mubr.bf16.mxu0 0
    %393 = vmatmul.mubr.bf16.gmra.mrb[0].mxu0 %v265
    %v394 = vpop.f32.mrb[0].mxu0
    %v395 = vadd.f32 %v89, %v394
    %v396 = vpop.f32.mrb[0].mxu0
    %v397 = vpop.f32.mrb[0].mxu0
    %v398 = vadd.f32 %v89, %v397
    %v399 = vpop.f32.mrb[0].mxu0
    %400 = vmatprep.mubr.bf16.mxu0 0
    %401 = vmatmul.mubr.bf16.gmra.mrb[0].mxu0 %v268
    %v402 = vpop.f32.mrb[0].mxu0
    %v403 = vadd.f32 %v89, %v402
    %v404 = vpop.f32.mrb[0].mxu0
    %v405 = vpop.f32.mrb[0].mxu0
    %v406 = vadd.f32 %v89, %v405
    %v407 = vpop.f32.mrb[0].mxu0
    %408 = vmatprep.mubr.bf16.mxu0 0
    %409 = vmatmul.mubr.bf16.gmra.mrb[0].mxu0 %v271
    %v410 = vpop.f32.mrb[0].mxu0
    %v411 = vadd.f32 %v89, %v410
    %v412 = vpop.f32.mrb[0].mxu0
    %v413 = vpop.f32.mrb[0].mxu0
    %v414 = vadd.f32 %v89, %v413
    %v415 = vpop.f32.mrb[0].mxu0
    %416 = vmatprep.mubr.bf16.mxu0 0
    %417 = vmatmul.mubr.bf16.gmra.mrb[0].mxu0 %v274
    %v418 = vpop.f32.mrb[0].mxu0
    %v419 = vadd.f32 %v89, %v418
    %v420 = vpop.f32.mrb[0].mxu0
    %v421 = vpop.f32.mrb[0].mxu0
    %v422 = vadd.f32 %v89, %v421
    %v423 = vpop.f32.mrb[0].mxu0
    %424 = vmatprep.mubr.bf16.mxu0 0
    %425 = vmatmul.mubr.bf16.gmra.mrb[0].mxu0 %v277
    %v426 = vpop.f32.mrb[0].mxu0
    %v427 = vadd.f32 %v89, %v426
    %v428 = vpop.f32.mrb[0].mxu0
    %v429 = vpop.f32.mrb[0].mxu0
    %v430 = vadd.f32 %v89, %v429
    %v431 = vpop.f32.mrb[0].mxu0
    %432 = vmatprep.mubr.bf16.mxu0 0
    %433 = vmatmul.mubr.bf16.gmra.mrb[0].mxu0 %v280
    %v434 = vpop.f32.mrb[0].mxu0
    %v435 = vadd.f32 %v89, %v434
    %v436 = vpop.f32.mrb[0].mxu0
    %v437 = vpop.f32.mrb[0].mxu0
    %v438 = vadd.f32 %v89, %v437
    %v439 = vpop.f32.mrb[0].mxu0
    %440 = vmatprep.mubr.bf16.mxu0 0
    %441 = vmatmul.mubr.bf16.gmra.mrb[0].mxu0 %v283
    %v442 = vpop.f32.mrb[0].mxu0
    %v443 = vadd.f32 %v89, %v442
    %v444 = vpop.f32.mrb[0].mxu0
    %v445 = vpop.f32.mrb[0].mxu0
    %v446 = vadd.f32 %v89, %v445
    %v447 = vpop.f32.mrb[0].mxu0
    %448 = vmatprep.mubr.bf16.mxu0 0
    %449 = vmatmul.mubr.bf16.gmra.mrb[0].mxu0 %v286
    %v450 = vpop.f32.mrb[0].mxu0
    %v451 = vadd.f32 %v89, %v450
    %v452 = vpop.f32.mrb[0].mxu0
    %v453 = vpop.f32.mrb[0].mxu0
    %v454 = vadd.f32 %v89, %v453
    %v455 = vpop.f32.mrb[0].mxu0
    %456 = vmatprep.mubr.bf16.mxu0 0
    %457 = vmatmul.mubr.bf16.gmra.mrb[0].mxu0 %v289
    %v458 = vpop.f32.mrb[0].mxu0
    %v459 = vadd.f32 %v89, %v458
    %v460 = vpop.f32.mrb[0].mxu0
    %v461 = vpop.f32.mrb[0].mxu0
    %v462 = vadd.f32 %v89, %v461
    %v463 = vpop.f32.mrb[0].mxu0
    %464 = vmatprep.mubr.bf16.mxu0 0
    %465 = vmatmul.mubr.bf16.gmra.mrb[0].mxu0 %v292
    %v466 = vpop.f32.mrb[0].mxu0
    %v467 = vadd.f32 %v89, %v466
    %v468 = vpop.f32.mrb[0].mxu0
    %v469 = vpop.f32.mrb[0].mxu0
    %v470 = vadd.f32 %v89, %v469
    %v471 = vpop.f32.mrb[0].mxu0
    %472 = vmatprep.mubr.bf16.mxu0 0
    %473 = vmatmul.mubr.bf16.gmra.mrb[0].mxu0 %v295
    %v474 = vpop.f32.mrb[0].mxu0
    %v475 = vadd.f32 %v89, %v474
    %v476 = vpop.f32.mrb[0].mxu0
    %v477 = vpop.f32.mrb[0].mxu0
    %v478 = vadd.f32 %v89, %v477
    %v479 = vpop.f32.mrb[0].mxu0
    %480 = vmatprep.mubr.bf16.mxu0 0
    %481 = vmatmul.mubr.bf16.gmra.mrb[0].mxu0 %v298
    %v482 = vpop.f32.mrb[0].mxu0
    %v483 = vadd.f32 %v89, %v482
    %v484 = vpop.f32.mrb[0].mxu0
    %v485 = vpop.f32.mrb[0].mxu0
    %v486 = vadd.f32 %v89, %v485
    %v487 = vpop.f32.mrb[0].mxu0
    %488 = vmatprep.mubr.bf16.mxu0 0
    %489 = vmatmul.mubr.bf16.gmra.mrb[0].mxu0 %v301
    %v490 = vpop.f32.mrb[0].mxu0
    %v491 = vadd.f32 %v89, %v490
    %v492 = vpop.f32.mrb[0].mxu0
    %v493 = vpop.f32.mrb[0].mxu0
    %v494 = vadd.f32 %v89, %v493
    %v495 = vpop.f32.mrb[0].mxu0
    %496 = vmatprep.mubr.bf16.mxu0 0
    %497 = vmatmul.mubr.bf16.gmra.mrb[0].mxu0 %v304
    %v498 = vpop.f32.mrb[0].mxu0
    %v499 = vadd.f32 %v89, %v498
    %v500 = vpop.f32.mrb[0].mxu0
    %v501 = vpop.f32.mrb[0].mxu0
    %v502 = vadd.f32 %v89, %v501
    %v503 = vpop.f32.mrb[0].mxu0
    %504 = vmatprep.mubr.bf16.mxu0 0
    %505 = vmatmul.mubr.bf16.gmra.mrb[0].mxu0 %v307
    %v506 = vpop.f32.mrb[0].mxu0
    %v507 = vadd.f32 %v89, %v506
    %v508 = vpop.f32.mrb[0].mxu0
    %v509 = vpop.f32.mrb[0].mxu0
    %v510 = vadd.f32 %v89, %v509
    %v511 = vpop.f32.mrb[0].mxu0
    %512 = vmatprep.mubr.bf16.mxu0 0
    %513 = vmatmul.mubr.bf16.gmra.mrb[0].mxu0 %v310
    %v514 = vpop.f32.mrb[0].mxu0
    %v515 = vadd.f32 %v89, %v514
    %v516 = vpop.f32.mrb[0].mxu0
    %v517 = vpop.f32.mrb[0].mxu0
    %v518 = vadd.f32 %v89, %v517
    %v519 = vpop.f32.mrb[0].mxu0
    %520 = vmatprep.mubr.bf16.mxu0 0
    %521 = vmatmul.mubr.bf16.gmra.mrb[0].mxu0 %v313
    %v522 = vpop.f32.mrb[0].mxu0
    %v523 = vadd.f32 %v89, %v522
    %v524 = vpop.f32.mrb[0].mxu0
    %v525 = vpop.f32.mrb[0].mxu0
    %v526 = vadd.f32 %v89, %v525
    %v527 = vpop.f32.mrb[0].mxu0
    %528 = vmatprep.mubr.bf16.mxu0 0
    %529 = vmatmul.mubr.bf16.gmra.mrb[0].mxu0 %v316
    %v530 = vpop.f32.mrb[0].mxu0
    %v531 = vadd.f32 %v89, %v530
    %v532 = vpop.f32.mrb[0].mxu0
    %v533 = vpop.f32.mrb[0].mxu0
    %v534 = vadd.f32 %v89, %v533
    %v535 = vpop.f32.mrb[0].mxu0
    %536 = vmatprep.mubr.bf16.mxu0 0
    %537 = vmatmul.mubr.bf16.gmra.mrb[0].mxu0 %v319
    %v538 = vpop.f32.mrb[0].mxu0
    %v539 = vadd.f32 %v89, %v538
    %v540 = vpop.f32.mrb[0].mxu0
    %v541 = vpop.f32.mrb[0].mxu0
    %v542 = vadd.f32 %v89, %v541
    %v543 = vpop.f32.mrb[0].mxu0
    %544 = vmatprep.mubr.bf16.mxu0 0
    %545 = vmatmul.mubr.bf16.gmra.mrb[0].mxu0 %v322
    %v546 = vpop.f32.mrb[0].mxu0
    %v547 = vadd.f32 %v89, %v546
    %v548 = vpop.f32.mrb[0].mxu0
    %v549 = vpop.f32.mrb[0].mxu0
    %v550 = vadd.f32 %v89, %v549
    %v551 = vpop.f32.mrb[0].mxu0
    %552 = vmatprep.mubr.bf16.mxu0 0
    %553 = vmatmul.mubr.bf16.gmra.mrb[0].mxu0 %v325
    %v554 = vpop.f32.mrb[0].mxu0
    %v555 = vadd.f32 %v89, %v554
    %v556 = vpop.f32.mrb[0].mxu0
    %v557 = vpop.f32.mrb[0].mxu0
    %v558 = vadd.f32 %v89, %v557
    %v559 = vpop.f32.mrb[0].mxu0
    %560 = vmatprep.mubr.bf16.mxu0 0
    %561 = vmatmul.mubr.bf16.gmra.mrb[0].mxu0 %v328
    %v562 = vpop.f32.mrb[0].mxu0
    %v563 = vadd.f32 %v89, %v562
    %v564 = vpop.f32.mrb[0].mxu0
    %v565 = vpop.f32.mrb[0].mxu0
    %v566 = vadd.f32 %v89, %v565
    %v567 = vpop.f32.mrb[0].mxu0
    %568 = vmatprep.mubr.bf16.mxu0 0
    %569 = vmatmul.mubr.bf16.gmra.mrb[0].mxu0 %v331
    %v570 = vpop.f32.mrb[0].mxu0
    %v571 = vadd.f32 %v89, %v570
    %v572 = vpop.f32.mrb[0].mxu0
    %v573 = vpop.f32.mrb[0].mxu0
    %v574 = vadd.f32 %v89, %v573
    %v575 = vpop.f32.mrb[0].mxu0
    %576 = vmatprep.mubr.bf16.mxu0 0
    %577 = vmatmul.mubr.bf16.gmra.mrb[0].mxu0 %v334
    %v578 = vpop.f32.mrb[0].mxu0
    %v579 = vadd.f32 %v89, %v578
    %v580 = vpop.f32.mrb[0].mxu0
    %v581 = vpop.f32.mrb[0].mxu0
    %v582 = vadd.f32 %v89, %v581
    %v583 = vpop.f32.mrb[0].mxu0
    %584 = vmatprep.mubr.bf16.mxu0 0
    %585 = vmatmul.mubr.bf16.gmra.mrb[0].mxu0 %v337
    %v586 = vpop.f32.mrb[0].mxu0
    %v587 = vadd.f32 %v89, %v586
    %v588 = vpop.f32.mrb[0].mxu0
    %v589 = vpop.f32.mrb[0].mxu0
    %v590 = vadd.f32 %v89, %v589
    %v591 = vpop.f32.mrb[0].mxu0
    %592 = vmatprep.mubr.bf16.mxu0 0
    %593 = vmatmul.mubr.bf16.gmra.mrb[0].mxu0 %v340
    %v594 = vpop.f32.mrb[0].mxu0
    %v595 = vadd.f32 %v89, %v594
    %v596 = vpop.f32.mrb[0].mxu0
    %v597 = vpop.f32.mrb[0].mxu0
    %v598 = vadd.f32 %v89, %v597
    %v599 = vpop.f32.mrb[0].mxu0
    %600 = vmatprep.mubr.bf16.mxu0 0
    %601 = vmatmul.mubr.bf16.gmra.mrb[0].mxu0 %v343
    %v602 = vpop.f32.mrb[0].mxu0
    %v603 = vadd.f32 %v89, %v602
    %v604 = vpop.f32.mrb[0].mxu0
    %v605 = vpop.f32.mrb[0].mxu0
    %v606 = vadd.f32 %v89, %v605
    %v607 = vpop.f32.mrb[0].mxu0
    %608 = vmatprep.mubr.bf16.mxu0 0
    %609 = vmatmul.mubr.bf16.gmra.mrb[0].mxu0 %v346
    %v610 = vpop.f32.mrb[0].mxu0
    %v611 = vadd.f32 %v89, %v610
    %v612 = vpop.f32.mrb[0].mxu0
    %v613 = vpop.f32.mrb[0].mxu0
    %v614 = vadd.f32 %v89, %v613
    %v615 = vpop.f32.mrb[0].mxu0
    %616 = vmatprep.mubr.bf16.mxu0 0
    %617 = vmatmul.mubr.bf16.gmra.mrb[0].mxu0 %v349
    %v618 = vpop.f32.mrb[0].mxu0
    %v619 = vadd.f32 %v89, %v618
    %v620 = vpop.f32.mrb[0].mxu0
    %v621 = vpop.f32.mrb[0].mxu0
    %v622 = vadd.f32 %v89, %v621
    %v623 = vpop.f32.mrb[0].mxu0
    %624 = vmatprep.mubr.bf16.mxu0 0
    %625 = vmatmul.mubr.bf16.gmra.mrb[0].mxu0 %v352
    %v626 = vpop.f32.mrb[0].mxu0
    %v627 = vadd.f32 %v89, %v626
    %v628 = vpop.f32.mrb[0].mxu0
    %v629 = vpop.f32.mrb[0].mxu0
    %v630 = vadd.f32 %v89, %v629
    %v631 = vpop.f32.mrb[0].mxu0
    %632 = vmatprep.mubr.bf16.mxu0 0
    %633 = vmatmul.mubr.bf16.gmra.mrb[0].mxu0 %v355
    %v634 = vpop.f32.mrb[0].mxu0
    %v635 = vadd.f32 %v89, %v634
    %v636 = vpop.f32.mrb[0].mxu0
    %v637 = vpop.f32.mrb[0].mxu0
    %v638 = vadd.f32 %v89, %v637
    %v639 = vpop.f32.mrb[0].mxu0
    %640 = vmatprep.mubr.bf16.mxu0 0
    %641 = vmatmul.mubr.bf16.gmra.mrb[0].mxu0 %v358
    %v642 = vpop.f32.mrb[0].mxu0
    %v643 = vadd.f32 %v89, %v642
    %v644 = vpop.f32.mrb[0].mxu0
    %v645 = vpop.f32.mrb[0].mxu0
    %v646 = vadd.f32 %v89, %v645
    %v647 = vpop.f32.mrb[0].mxu0
    %648 = vdwg.mxu0
    %v649 = vxor.u32 %v395, 2147483648
    %v650 = vxor.u32 %v398, 2147483648
    %v651 = vxor.u32 %v403, 2147483648
    %v652 = vxor.u32 %v406, 2147483648
    %v653 = vxor.u32 %v411, 2147483648
    %v654 = vxor.u32 %v414, 2147483648
    %v655 = vxor.u32 %v419, 2147483648
    %v656 = vxor.u32 %v422, 2147483648
    %v657 = vxor.u32 %v427, 2147483648
    %v658 = vxor.u32 %v430, 2147483648
    %v659 = vxor.u32 %v435, 2147483648
    %v660 = vxor.u32 %v438, 2147483648
    %v661 = vxor.u32 %v443, 2147483648
    %v662 = vxor.u32 %v446, 2147483648
    %v663 = vxor.u32 %v451, 2147483648
    %v664 = vxor.u32 %v454, 2147483648
    %v665 = vxor.u32 %v459, 2147483648
    %v666 = vxor.u32 %v462, 2147483648
    %v667 = vxor.u32 %v467, 2147483648
    %v668 = vxor.u32 %v470, 2147483648
    %v669 = vxor.u32 %v475, 2147483648
    %v670 = vxor.u32 %v478, 2147483648
    %v671 = vxor.u32 %v483, 2147483648
    %v672 = vxor.u32 %v486, 2147483648
    %v673 = vxor.u32 %v491, 2147483648
    %v674 = vxor.u32 %v494, 2147483648
    %v675 = vxor.u32 %v499, 2147483648
    %v676 = vxor.u32 %v502, 2147483648
    %v677 = vxor.u32 %v507, 2147483648
    %v678 = vxor.u32 %v510, 2147483648
    %v679 = vxor.u32 %v515, 2147483648
    %v680 = vxor.u32 %v518, 2147483648
    %v681 = vxor.u32 %v523, 2147483648
    %v682 = vxor.u32 %v526, 2147483648
    %v683 = vxor.u32 %v531, 2147483648
    %v684 = vxor.u32 %v534, 2147483648
    %v685 = vxor.u32 %v539, 2147483648
    %v686 = vxor.u32 %v542, 2147483648
    %v687 = vxor.u32 %v547, 2147483648
    %v688 = vxor.u32 %v550, 2147483648
    %v689 = vxor.u32 %v555, 2147483648
    %v690 = vxor.u32 %v558, 2147483648
    %v691 = vxor.u32 %v563, 2147483648
    %v692 = vxor.u32 %v566, 2147483648
    %v693 = vxor.u32 %v571, 2147483648
    %v694 = vxor.u32 %v574, 2147483648
    %v695 = vxor.u32 %v579, 2147483648
    %v696 = vxor.u32 %v582, 2147483648
    %v697 = vxor.u32 %v587, 2147483648
    %v698 = vxor.u32 %v590, 2147483648
    %v699 = vxor.u32 %v595, 2147483648
    %v700 = vxor.u32 %v598, 2147483648
    %v701 = vxor.u32 %v603, 2147483648
    %v702 = vxor.u32 %v606, 2147483648
    %v703 = vxor.u32 %v611, 2147483648
    %v704 = vxor.u32 %v614, 2147483648
    %v705 = vxor.u32 %v619, 2147483648
    %v706 = vxor.u32 %v622, 2147483648
    %v707 = vxor.u32 %v627, 2147483648
    %v708 = vxor.u32 %v630, 2147483648
    %v709 = vxor.u32 %v635, 2147483648
    %v710 = vxor.u32 %v638, 2147483648
    %v711 = vxor.u32 %v643, 2147483648
    %v712 = vxor.u32 %v646, 2147483648
    %v713 = vmul.f32 %v649, 1.442695
    %v714 = vpow.pop %v713
    %v715 = vmul.f32 %v650, 1.442695
    %v716 = vpow.pop %v715
    %v717 = vmul.f32 %v651, 1.442695
    %v718 = vpow.pop %v717
    %v719 = vmul.f32 %v652, 1.442695
    %v720 = vpow.pop %v719
    %v721 = vmul.f32 %v653, 1.442695
    %v722 = vpow.pop %v721
    %v723 = vmul.f32 %v654, 1.442695
    %v724 = vpow.pop %v723
    %v725 = vmul.f32 %v655, 1.442695
    %v726 = vpow.pop %v725
    %v727 = vmul.f32 %v656, 1.442695
    %v728 = vpow.pop %v727
    %v729 = vmul.f32 %v657, 1.442695
    %v730 = vpow.pop %v729
    %v731 = vmul.f32 %v658, 1.442695
    %v732 = vpow.pop %v731
    %v733 = vmul.f32 %v659, 1.442695
    %v734 = vpow.pop %v733
    %v735 = vmul.f32 %v660, 1.442695
    %v736 = vpow.pop %v735
    %v737 = vmul.f32 %v661, 1.442695
    %v738 = vpow.pop %v737
    %v739 = vmul.f32 %v662, 1.442695
    %v740 = vpow.pop %v739
    %v741 = vmul.f32 %v663, 1.442695
    %v742 = vpow.pop %v741
    %v743 = vmul.f32 %v664, 1.442695
    %v744 = vpow.pop %v743
    %v745 = vmul.f32 %v665, 1.442695
    %v746 = vpow.pop %v745
    %v747 = vmul.f32 %v666, 1.442695
    %v748 = vpow.pop %v747
    %v749 = vmul.f32 %v667, 1.442695
    %v750 = vpow.pop %v749
    %v751 = vmul.f32 %v668, 1.442695
    %v752 = vpow.pop %v751
    %v753 = vmul.f32 %v669, 1.442695
    %v754 = vpow.pop %v753
    %v755 = vmul.f32 %v670, 1.442695
    %v756 = vpow.pop %v755
    %v757 = vmul.f32 %v671, 1.442695
    %v758 = vpow.pop %v757
    %v759 = vmul.f32 %v672, 1.442695
    %v760 = vpow.pop %v759
    %v761 = vmul.f32 %v673, 1.442695
    %v762 = vpow.pop %v761
    %v763 = vmul.f32 %v674, 1.442695
    %v764 = vpow.pop %v763
    %v765 = vmul.f32 %v675, 1.442695
    %v766 = vpow.pop %v765
    %v767 = vmul.f32 %v676, 1.442695
    %v768 = vpow.pop %v767
    %v769 = vmul.f32 %v677, 1.442695
    %v770 = vpow.pop %v769
    %v771 = vmul.f32 %v678, 1.442695
    %v772 = vpow.pop %v771
    %v773 = vmul.f32 %v679, 1.442695
    %v774 = vpow.pop %v773
    %v775 = vmul.f32 %v680, 1.442695
    %v776 = vpow.pop %v775
    %v777 = vmul.f32 %v681, 1.442695
    %v778 = vpow.pop %v777
    %v779 = vmul.f32 %v682, 1.442695
    %v780 = vpow.pop %v779
    %v781 = vmul.f32 %v683, 1.442695
    %v782 = vpow.pop %v781
    %v783 = vmul.f32 %v684, 1.442695
    %v784 = vpow.pop %v783
    %v785 = vmul.f32 %v685, 1.442695
    %v786 = vpow.pop %v785
    %v787 = vmul.f32 %v686, 1.442695
    %v788 = vpow.pop %v787
    %v789 = vmul.f32 %v687, 1.442695
    %v790 = vpow.pop %v789
    %v791 = vmul.f32 %v688, 1.442695
    %v792 = vpow.pop %v791
    %v793 = vmul.f32 %v689, 1.442695
    %v794 = vpow.pop %v793
    %v795 = vmul.f32 %v690, 1.442695
    %v796 = vpow.pop %v795
    %v797 = vmul.f32 %v691, 1.442695
    %v798 = vpow.pop %v797
    %v799 = vmul.f32 %v692, 1.442695
    %v800 = vpow.pop %v799
    %v801 = vmul.f32 %v693, 1.442695
    %v802 = vpow.pop %v801
    %v803 = vmul.f32 %v694, 1.442695
    %v804 = vpow.pop %v803
    %v805 = vmul.f32 %v695, 1.442695
    %v806 = vpow.pop %v805
    %v807 = vmul.f32 %v696, 1.442695
    %v808 = vpow.pop %v807
    %v809 = vmul.f32 %v697, 1.442695
    %v810 = vpow.pop %v809
    %v811 = vmul.f32 %v698, 1.442695
    %v812 = vpow.pop %v811
    %v813 = vmul.f32 %v699, 1.442695
    %v814 = vpow.pop %v813
    %v815 = vmul.f32 %v700, 1.442695
    %v816 = vpow.pop %v815
    %v817 = vmul.f32 %v701, 1.442695
    %v818 = vpow.pop %v817
    %v819 = vmul.f32 %v702, 1.442695
    %v820 = vpow.pop %v819
    %v821 = vmul.f32 %v703, 1.442695
    %v822 = vpow.pop %v821
    %v823 = vmul.f32 %v704, 1.442695
    %v824 = vpow.pop %v823
    %v825 = vmul.f32 %v705, 1.442695
    %v826 = vpow.pop %v825
    %v827 = vmul.f32 %v706, 1.442695
    %v828 = vpow.pop %v827
    %v829 = vmul.f32 %v707, 1.442695
    %v830 = vpow.pop %v829
    %v831 = vmul.f32 %v708, 1.442695
    %v832 = vpow.pop %v831
    %v833 = vmul.f32 %v709, 1.442695
    %v834 = vpow.pop %v833
    %v835 = vmul.f32 %v710, 1.442695
    %v836 = vpow.pop %v835
    %v837 = vmul.f32 %v711, 1.442695
    %v838 = vpow.pop %v837
    %v839 = vmul.f32 %v712, 1.442695
    %v840 = vpow.pop %v839
    %v841 = vadd.f32 %v714, 1.0
    %v842 = vadd.f32 %v716, 1.0
    %v843 = vadd.f32 %v718, 1.0
    %v844 = vadd.f32 %v720, 1.0
    %v845 = vadd.f32 %v722, 1.0
    %v846 = vadd.f32 %v724, 1.0
    %v847 = vadd.f32 %v726, 1.0
    %v848 = vadd.f32 %v728, 1.0
    %v849 = vadd.f32 %v730, 1.0
    %v850 = vadd.f32 %v732, 1.0
    %v851 = vadd.f32 %v734, 1.0
    %v852 = vadd.f32 %v736, 1.0
    %v853 = vadd.f32 %v738, 1.0
    %v854 = vadd.f32 %v740, 1.0
    %v855 = vadd.f32 %v742, 1.0
    %v856 = vadd.f32 %v744, 1.0
    %v857 = vadd.f32 %v746, 1.0
    %v858 = vadd.f32 %v748, 1.0
    %v859 = vadd.f32 %v750, 1.0
    %v860 = vadd.f32 %v752, 1.0
    %v861 = vadd.f32 %v754, 1.0
    %v862 = vadd.f32 %v756, 1.0
    %v863 = vadd.f32 %v758, 1.0
    %v864 = vadd.f32 %v760, 1.0
    %v865 = vadd.f32 %v762, 1.0
    %v866 = vadd.f32 %v764, 1.0
    %v867 = vadd.f32 %v766, 1.0
    %v868 = vadd.f32 %v768, 1.0
    %v869 = vadd.f32 %v770, 1.0
    %v870 = vadd.f32 %v772, 1.0
    %v871 = vadd.f32 %v774, 1.0
    %v872 = vadd.f32 %v776, 1.0
    %v873 = vadd.f32 %v778, 1.0
    %v874 = vadd.f32 %v780, 1.0
    %v875 = vadd.f32 %v782, 1.0
    %v876 = vadd.f32 %v784, 1.0
    %v877 = vadd.f32 %v786, 1.0
    %v878 = vadd.f32 %v788, 1.0
    %v879 = vadd.f32 %v790, 1.0
    %v880 = vadd.f32 %v792, 1.0
    %v881 = vadd.f32 %v794, 1.0
    %v882 = vadd.f32 %v796, 1.0
    %v883 = vadd.f32 %v798, 1.0
    %v884 = vadd.f32 %v800, 1.0
    %v885 = vadd.f32 %v802, 1.0
    %v886 = vadd.f32 %v804, 1.0
    %v887 = vadd.f32 %v806, 1.0
    %v888 = vadd.f32 %v808, 1.0
    %v889 = vadd.f32 %v810, 1.0
    %v890 = vadd.f32 %v812, 1.0
    %v891 = vadd.f32 %v814, 1.0
    %v892 = vadd.f32 %v816, 1.0
    %v893 = vadd.f32 %v818, 1.0
    %v894 = vadd.f32 %v820, 1.0
    %v895 = vadd.f32 %v822, 1.0
    %v896 = vadd.f32 %v824, 1.0
    %v897 = vadd.f32 %v826, 1.0
    %v898 = vadd.f32 %v828, 1.0
    %v899 = vadd.f32 %v830, 1.0
    %v900 = vadd.f32 %v832, 1.0
    %v901 = vadd.f32 %v834, 1.0
    %v902 = vadd.f32 %v836, 1.0
    %v903 = vadd.f32 %v838, 1.0
    %v904 = vadd.f32 %v840, 1.0
    %v905 = vrcp.pop %v841
    %v906 = vmul.f32 1.0, %v905
    %v907 = vrcp.pop %v842
    %v908 = vmul.f32 1.0, %v907
    %v909 = vrcp.pop %v843
    %v910 = vmul.f32 1.0, %v909
    %v911 = vrcp.pop %v844
    %v912 = vmul.f32 1.0, %v911
    %v913 = vrcp.pop %v845
    %v914 = vmul.f32 1.0, %v913
    %v915 = vrcp.pop %v846
    %v916 = vmul.f32 1.0, %v915
    %v917 = vrcp.pop %v847
    %v918 = vmul.f32 1.0, %v917
    %v919 = vrcp.pop %v848
    %v920 = vmul.f32 1.0, %v919
    %v921 = vrcp.pop %v849
    %v922 = vmul.f32 1.0, %v921
    %v923 = vrcp.pop %v850
    %v924 = vmul.f32 1.0, %v923
    %v925 = vrcp.pop %v851
    %v926 = vmul.f32 1.0, %v925
    %v927 = vrcp.pop %v852
    %v928 = vmul.f32 1.0, %v927
    %v929 = vrcp.pop %v853
    %v930 = vmul.f32 1.0, %v929
    %v931 = vrcp.pop %v854
    %v932 = vmul.f32 1.0, %v931
    %v933 = vrcp.pop %v855
    %v934 = vmul.f32 1.0, %v933
    %v935 = vrcp.pop %v856
    %v936 = vmul.f32 1.0, %v935
    %v937 = vrcp.pop %v857
    %v938 = vmul.f32 1.0, %v937
    %v939 = vrcp.pop %v858
    %v940 = vmul.f32 1.0, %v939
    %v941 = vrcp.pop %v859
    %v942 = vmul.f32 1.0, %v941
    %v943 = vrcp.pop %v860
    %v944 = vmul.f32 1.0, %v943
    %v945 = vrcp.pop %v861
    %v946 = vmul.f32 1.0, %v945
    %v947 = vrcp.pop %v862
    %v948 = vmul.f32 1.0, %v947
    %v949 = vrcp.pop %v863
    %v950 = vmul.f32 1.0, %v949
    %v951 = vrcp.pop %v864
    %v952 = vmul.f32 1.0, %v951
    %v953 = vrcp.pop %v865
    %v954 = vmul.f32 1.0, %v953
    %v955 = vrcp.pop %v866
    %v956 = vmul.f32 1.0, %v955
    %v957 = vrcp.pop %v867
    %v958 = vmul.f32 1.0, %v957
    %v959 = vrcp.pop %v868
    %v960 = vmul.f32 1.0, %v959
    %v961 = vrcp.pop %v869
    %v962 = vmul.f32 1.0, %v961
    %v963 = vrcp.pop %v870
    %v964 = vmul.f32 1.0, %v963
    %v965 = vrcp.pop %v871
    %v966 = vmul.f32 1.0, %v965
    %v967 = vrcp.pop %v872
    %v968 = vmul.f32 1.0, %v967
    %v969 = vrcp.pop %v873
    %v970 = vmul.f32 1.0, %v969
    %v971 = vrcp.pop %v874
    %v972 = vmul.f32 1.0, %v971
    %v973 = vrcp.pop %v875
    %v974 = vmul.f32 1.0, %v973
    %v975 = vrcp.pop %v876
    %v976 = vmul.f32 1.0, %v975
    %v977 = vrcp.pop %v877
    %v978 = vmul.f32 1.0, %v977
    %v979 = vrcp.pop %v878
    %v980 = vmul.f32 1.0, %v979
    %v981 = vrcp.pop %v879
    %v982 = vmul.f32 1.0, %v981
    %v983 = vrcp.pop %v880
    %v984 = vmul.f32 1.0, %v983
    %v985 = vrcp.pop %v881
    %v986 = vmul.f32 1.0, %v985
    %v987 = vrcp.pop %v882
    %v988 = vmul.f32 1.0, %v987
    %v989 = vrcp.pop %v883
    %v990 = vmul.f32 1.0, %v989
    %v991 = vrcp.pop %v884
    %v992 = vmul.f32 1.0, %v991
    %v993 = vrcp.pop %v885
    %v994 = vmul.f32 1.0, %v993
    %v995 = vrcp.pop %v886
    %v996 = vmul.f32 1.0, %v995
    %v997 = vrcp.pop %v887
    %v998 = vmul.f32 1.0, %v997
    %v999 = vrcp.pop %v888
    %v1000 = vmul.f32 1.0, %v999
    %v1001 = vrcp.pop %v889
    %v1002 = vmul.f32 1.0, %v1001
    %v1003 = vrcp.pop %v890
    %v1004 = vmul.f32 1.0, %v1003
    %v1005 = vrcp.pop %v891
    %v1006 = vmul.f32 1.0, %v1005
    %v1007 = vrcp.pop %v892
    %v1008 = vmul.f32 1.0, %v1007
    %v1009 = vrcp.pop %v893
    %v1010 = vmul.f32 1.0, %v1009
    %v1011 = vrcp.pop %v894
    %v1012 = vmul.f32 1.0, %v1011
    %v1013 = vrcp.pop %v895
    %v1014 = vmul.f32 1.0, %v1013
    %v1015 = vrcp.pop %v896
    %v1016 = vmul.f32 1.0, %v1015
    %v1017 = vrcp.pop %v897
    %v1018 = vmul.f32 1.0, %v1017
    %v1019 = vrcp.pop %v898
    %v1020 = vmul.f32 1.0, %v1019
    %v1021 = vrcp.pop %v899
    %v1022 = vmul.f32 1.0, %v1021
    %v1023 = vrcp.pop %v900
    %v1024 = vmul.f32 1.0, %v1023
    %v1025 = vrcp.pop %v901
    %v1026 = vmul.f32 1.0, %v1025
    %v1027 = vrcp.pop %v902
    %v1028 = vmul.f32 1.0, %v1027
    %v1029 = vrcp.pop %v903
    %v1030 = vmul.f32 1.0, %v1029
    %v1031 = vrcp.pop %v904
    %v1032 = vmul.f32 1.0, %v1031
    %v1033 = vmul.f32 %v395, %v906
    %v1034 = vmul.f32 %v398, %v908
    %v1035 = vmul.f32 %v403, %v910
    %v1036 = vmul.f32 %v406, %v912
    %v1037 = vmul.f32 %v411, %v914
    %v1038 = vmul.f32 %v414, %v916
    %v1039 = vmul.f32 %v419, %v918
    %v1040 = vmul.f32 %v422, %v920
    %v1041 = vmul.f32 %v427, %v922
    %v1042 = vmul.f32 %v430, %v924
    %v1043 = vmul.f32 %v435, %v926
    %v1044 = vmul.f32 %v438, %v928
    %v1045 = vmul.f32 %v443, %v930
    %v1046 = vmul.f32 %v446, %v932
    %v1047 = vmul.f32 %v451, %v934
    %v1048 = vmul.f32 %v454, %v936
    %v1049 = vmul.f32 %v459, %v938
    %v1050 = vmul.f32 %v462, %v940
    %v1051 = vmul.f32 %v467, %v942
    %v1052 = vmul.f32 %v470, %v944
    %v1053 = vmul.f32 %v475, %v946
    %v1054 = vmul.f32 %v478, %v948
    %v1055 = vmul.f32 %v483, %v950
    %v1056 = vmul.f32 %v486, %v952
    %v1057 = vmul.f32 %v491, %v954
    %v1058 = vmul.f32 %v494, %v956
    %v1059 = vmul.f32 %v499, %v958
    %v1060 = vmul.f32 %v502, %v960
    %v1061 = vmul.f32 %v507, %v962
    %v1062 = vmul.f32 %v510, %v964
    %v1063 = vmul.f32 %v515, %v966
    %v1064 = vmul.f32 %v518, %v968
    %v1065 = vmul.f32 %v523, %v970
    %v1066 = vmul.f32 %v526, %v972
    %v1067 = vmul.f32 %v531, %v974
    %v1068 = vmul.f32 %v534, %v976
    %v1069 = vmul.f32 %v539, %v978
    %v1070 = vmul.f32 %v542, %v980
    %v1071 = vmul.f32 %v547, %v982
    %v1072 = vmul.f32 %v550, %v984
    %v1073 = vmul.f32 %v555, %v986
    %v1074 = vmul.f32 %v558, %v988
    %v1075 = vmul.f32 %v563, %v990
    %v1076 = vmul.f32 %v566, %v992
    %v1077 = vmul.f32 %v571, %v994
    %v1078 = vmul.f32 %v574, %v996
    %v1079 = vmul.f32 %v579, %v998
    %v1080 = vmul.f32 %v582, %v1000
    %v1081 = vmul.f32 %v587, %v1002
    %v1082 = vmul.f32 %v590, %v1004
    %v1083 = vmul.f32 %v595, %v1006
    %v1084 = vmul.f32 %v598, %v1008
    %v1085 = vmul.f32 %v603, %v1010
    %v1086 = vmul.f32 %v606, %v1012
    %v1087 = vmul.f32 %v611, %v1014
    %v1088 = vmul.f32 %v614, %v1016
    %v1089 = vmul.f32 %v619, %v1018
    %v1090 = vmul.f32 %v622, %v1020
    %v1091 = vmul.f32 %v627, %v1022
    %v1092 = vmul.f32 %v630, %v1024
    %v1093 = vmul.f32 %v635, %v1026
    %v1094 = vmul.f32 %v638, %v1028
    %v1095 = vmul.f32 %v643, %v1030
    %v1096 = vmul.f32 %v646, %v1032
    %v1097 = vpack.c.bf16 %v1034, %v1033
    %v1098 = vpack.c.bf16 %v1036, %v1035
    %v1099 = vpack.c.bf16 %v1038, %v1037
    %v1100 = vpack.c.bf16 %v1040, %v1039
    %v1101 = vpack.c.bf16 %v1042, %v1041
    %v1102 = vpack.c.bf16 %v1044, %v1043
    %v1103 = vpack.c.bf16 %v1046, %v1045
    %v1104 = vpack.c.bf16 %v1048, %v1047
    %v1105 = vpack.c.bf16 %v1050, %v1049
    %v1106 = vpack.c.bf16 %v1052, %v1051
    %v1107 = vpack.c.bf16 %v1054, %v1053
    %v1108 = vpack.c.bf16 %v1056, %v1055
    %v1109 = vpack.c.bf16 %v1058, %v1057
    %v1110 = vpack.c.bf16 %v1060, %v1059
    %v1111 = vpack.c.bf16 %v1062, %v1061
    %v1112 = vpack.c.bf16 %v1064, %v1063
    %v1113 = vpack.c.bf16 %v1066, %v1065
    %v1114 = vpack.c.bf16 %v1068, %v1067
    %v1115 = vpack.c.bf16 %v1070, %v1069
    %v1116 = vpack.c.bf16 %v1072, %v1071
    %v1117 = vpack.c.bf16 %v1074, %v1073
    %v1118 = vpack.c.bf16 %v1076, %v1075
    %v1119 = vpack.c.bf16 %v1078, %v1077
    %v1120 = vpack.c.bf16 %v1080, %v1079
    %v1121 = vpack.c.bf16 %v1082, %v1081
    %v1122 = vpack.c.bf16 %v1084, %v1083
    %v1123 = vpack.c.bf16 %v1086, %v1085
    %v1124 = vpack.c.bf16 %v1088, %v1087
    %v1125 = vpack.c.bf16 %v1090, %v1089
    %v1126 = vpack.c.bf16 %v1092, %v1091
    %v1127 = vpack.c.bf16 %v1094, %v1093
    %v1128 = vpack.c.bf16 %v1096, %v1095
    %v1161 = vunpack.c.l.b16 %v1097
    %v1162 = vunpack.c.h.b16 %v1097
    %v1163 = vunpack.c.l.b16 %v1098
    %v1164 = vunpack.c.h.b16 %v1098
    %v1165 = vunpack.c.l.b16 %v1099
    %v1166 = vunpack.c.h.b16 %v1099
    %v1167 = vunpack.c.l.b16 %v1100
    %v1168 = vunpack.c.h.b16 %v1100
    %v1169 = vunpack.c.l.b16 %v1101
    %v1170 = vunpack.c.h.b16 %v1101
    %v1171 = vunpack.c.l.b16 %v1102
    %v1172 = vunpack.c.h.b16 %v1102
    %v1173 = vunpack.c.l.b16 %v1103
    %v1174 = vunpack.c.h.b16 %v1103
    %v1175 = vunpack.c.l.b16 %v1104
    %v1176 = vunpack.c.h.b16 %v1104
    %v1177 = vunpack.c.l.b16 %v1105
    %v1178 = vunpack.c.h.b16 %v1105
    %v1179 = vunpack.c.l.b16 %v1106
    %v1180 = vunpack.c.h.b16 %v1106
    %v1181 = vunpack.c.l.b16 %v1107
    %v1182 = vunpack.c.h.b16 %v1107
    %v1183 = vunpack.c.l.b16 %v1108
    %v1184 = vunpack.c.h.b16 %v1108
    %v1185 = vunpack.c.l.b16 %v1109
    %v1186 = vunpack.c.h.b16 %v1109
    %v1187 = vunpack.c.l.b16 %v1110
    %v1188 = vunpack.c.h.b16 %v1110
    %v1189 = vunpack.c.l.b16 %v1111
    %v1190 = vunpack.c.h.b16 %v1111
    %v1191 = vunpack.c.l.b16 %v1112
    %v1192 = vunpack.c.h.b16 %v1112
    %v1193 = vunpack.c.l.b16 %v1113
    %v1194 = vunpack.c.h.b16 %v1113
    %v1195 = vunpack.c.l.b16 %v1114
    %v1196 = vunpack.c.h.b16 %v1114
    %v1197 = vunpack.c.l.b16 %v1115
    %v1198 = vunpack.c.h.b16 %v1115
    %v1199 = vunpack.c.l.b16 %v1116
    %v1200 = vunpack.c.h.b16 %v1116
    %v1201 = vunpack.c.l.b16 %v1117
    %v1202 = vunpack.c.h.b16 %v1117
    %v1203 = vunpack.c.l.b16 %v1118
    %v1204 = vunpack.c.h.b16 %v1118
    %v1205 = vunpack.c.l.b16 %v1119
    %v1206 = vunpack.c.h.b16 %v1119
    %v1207 = vunpack.c.l.b16 %v1120
    %v1208 = vunpack.c.h.b16 %v1120
    %v1209 = vunpack.c.l.b16 %v1121
    %v1210 = vunpack.c.h.b16 %v1121
    %v1211 = vunpack.c.l.b16 %v1122
    %v1212 = vunpack.c.h.b16 %v1122
    %v1213 = vunpack.c.l.b16 %v1123
    %v1214 = vunpack.c.h.b16 %v1123
    %v1215 = vunpack.c.l.b16 %v1124
    %v1216 = vunpack.c.h.b16 %v1124
    %v1217 = vunpack.c.l.b16 %v1125
    %v1218 = vunpack.c.h.b16 %v1125
    %v1219 = vunpack.c.l.b16 %v1126
    %v1220 = vunpack.c.h.b16 %v1126
    %v1221 = vunpack.c.l.b16 %v1127
    %v1222 = vunpack.c.h.b16 %v1127
    %v1223 = vunpack.c.l.b16 %v1128
    %v1224 = vunpack.c.h.b16 %v1128
    %v1225 = vpack.c.b16 %v1161, %v1161
    %v1226 = vpack.c.b16 %v1162, %v1162
    %v1227 = vpack.c.b16 %v1163, %v1163
    %v1228 = vpack.c.b16 %v1164, %v1164
    %v1229 = vpack.c.b16 %v1165, %v1165
    %v1230 = vpack.c.b16 %v1166, %v1166
    %v1231 = vpack.c.b16 %v1167, %v1167
    %v1232 = vpack.c.b16 %v1168, %v1168
    %v1233 = vpack.c.b16 %v1169, %v1169
    %v1234 = vpack.c.b16 %v1170, %v1170
    %v1235 = vpack.c.b16 %v1171, %v1171
    %v1236 = vpack.c.b16 %v1172, %v1172
    %v1237 = vpack.c.b16 %v1173, %v1173
    %v1238 = vpack.c.b16 %v1174, %v1174
    %v1239 = vpack.c.b16 %v1175, %v1175
    %v1240 = vpack.c.b16 %v1176, %v1176
    %v1241 = vpack.c.b16 %v1177, %v1177
    %v1242 = vpack.c.b16 %v1178, %v1178
    %v1243 = vpack.c.b16 %v1179, %v1179
    %v1244 = vpack.c.b16 %v1180, %v1180
    %v1245 = vpack.c.b16 %v1181, %v1181
    %v1246 = vpack.c.b16 %v1182, %v1182
    %v1247 = vpack.c.b16 %v1183, %v1183
    %v1248 = vpack.c.b16 %v1184, %v1184
    %v1249 = vpack.c.b16 %v1185, %v1185
    %v1250 = vpack.c.b16 %v1186, %v1186
    %v1251 = vpack.c.b16 %v1187, %v1187
    %v1252 = vpack.c.b16 %v1188, %v1188
    %v1253 = vpack.c.b16 %v1189, %v1189
    %v1254 = vpack.c.b16 %v1190, %v1190
    %v1255 = vpack.c.b16 %v1191, %v1191
    %v1256 = vpack.c.b16 %v1192, %v1192
    %v1257 = vpack.c.b16 %v1193, %v1193
    %v1258 = vpack.c.b16 %v1194, %v1194
    %v1259 = vpack.c.b16 %v1195, %v1195
    %v1260 = vpack.c.b16 %v1196, %v1196
    %v1261 = vpack.c.b16 %v1197, %v1197
    %v1262 = vpack.c.b16 %v1198, %v1198
    %v1263 = vpack.c.b16 %v1199, %v1199
    %v1264 = vpack.c.b16 %v1200, %v1200
    %v1265 = vpack.c.b16 %v1201, %v1201
    %v1266 = vpack.c.b16 %v1202, %v1202
    %v1267 = vpack.c.b16 %v1203, %v1203
    %v1268 = vpack.c.b16 %v1204, %v1204
    %v1269 = vpack.c.b16 %v1205, %v1205
    %v1270 = vpack.c.b16 %v1206, %v1206
    %v1271 = vpack.c.b16 %v1207, %v1207
    %v1272 = vpack.c.b16 %v1208, %v1208
    %v1273 = vpack.c.b16 %v1209, %v1209
    %v1274 = vpack.c.b16 %v1210, %v1210
    %v1275 = vpack.c.b16 %v1211, %v1211
    %v1276 = vpack.c.b16 %v1212, %v1212
    %v1277 = vpack.c.b16 %v1213, %v1213
    %v1278 = vpack.c.b16 %v1214, %v1214
    %v1279 = vpack.c.b16 %v1215, %v1215
    %v1280 = vpack.c.b16 %v1216, %v1216
    %v1281 = vpack.c.b16 %v1217, %v1217
    %v1282 = vpack.c.b16 %v1218, %v1218
    %v1283 = vpack.c.b16 %v1219, %v1219
    %v1284 = vpack.c.b16 %v1220, %v1220
    %v1285 = vpack.c.b16 %v1221, %v1221
    %v1286 = vpack.c.b16 %v1222, %v1222
    %v1287 = vpack.c.b16 %v1223, %v1223
    %v1288 = vpack.c.b16 %v1224, %v1224
    %1353 = vst [vmem:[#allocation2] sm:$0xf] %v1225
    %1354 = vst [vmem:[#allocation2 + $0x4] sm:$0xf] %v1226
    %1355 = vst [vmem:[#allocation2 + $0x8] sm:$0xf] %v1227
    %1356 = vst [vmem:[#allocation2 + $0xc] sm:$0xf] %v1228
    %1357 = vst [vmem:[#allocation2 + $0x10] sm:$0xf] %v1229
    %1358 = vst [vmem:[#allocation2 + $0x14] sm:$0xf] %v1230
    %1359 = vst [vmem:[#allocation2 + $0x18] sm:$0xf] %v1231
    %1360 = vst [vmem:[#allocation2 + $0x1c] sm:$0xf] %v1232
    %1361 = vst [vmem:[#allocation2 + $0x20] sm:$0xf] %v1233
    %1362 = vst [vmem:[#allocation2 + $0x24] sm:$0xf] %v1234
    %1363 = vst [vmem:[#allocation2 + $0x28] sm:$0xf] %v1235
    %1364 = vst [vmem:[#allocation2 + $0x2c] sm:$0xf] %v1236
    %1365 = vst [vmem:[#allocation2 + $0x30] sm:$0xf] %v1237
    %1366 = vst [vmem:[#allocation2 + $0x34] sm:$0xf] %v1238
    %1367 = vst [vmem:[#allocation2 + $0x38] sm:$0xf] %v1239
    %1368 = vst [vmem:[#allocation2 + $0x3c] sm:$0xf] %v1240
    %1369 = vst [vmem:[#allocation2 + $0x40] sm:$0xf] %v1241
    %1370 = vst [vmem:[#allocation2 + $0x44] sm:$0xf] %v1242
    %1371 = vst [vmem:[#allocation2 + $0x48] sm:$0xf] %v1243
    %1372 = vst [vmem:[#allocation2 + $0x4c] sm:$0xf] %v1244
    %1373 = vst [vmem:[#allocation2 + $0x50] sm:$0xf] %v1245
    %1374 = vst [vmem:[#allocation2 + $0x54] sm:$0xf] %v1246
    %1375 = vst [vmem:[#allocation2 + $0x58] sm:$0xf] %v1247
    %1376 = vst [vmem:[#allocation2 + $0x5c] sm:$0xf] %v1248
    %1377 = vst [vmem:[#allocation2 + $0x60] sm:$0xf] %v1249
    %1378 = vst [vmem:[#allocation2 + $0x64] sm:$0xf] %v1250
    %1379 = vst [vmem:[#allocation2 + $0x68] sm:$0xf] %v1251
    %1380 = vst [vmem:[#allocation2 + $0x6c] sm:$0xf] %v1252
    %1381 = vst [vmem:[#allocation2 + $0x70] sm:$0xf] %v1253
    %1382 = vst [vmem:[#allocation2 + $0x74] sm:$0xf] %v1254
    %1383 = vst [vmem:[#allocation2 + $0x78] sm:$0xf] %v1255
    %1384 = vst [vmem:[#allocation2 + $0x7c] sm:$0xf] %v1256
    %1385 = vst [vmem:[#allocation2 + $0x80] sm:$0xf] %v1257
    %1386 = vst [vmem:[#allocation2 + $0x84] sm:$0xf] %v1258
    %1387 = vst [vmem:[#allocation2 + $0x88] sm:$0xf] %v1259
    %1388 = vst [vmem:[#allocation2 + $0x8c] sm:$0xf] %v1260
    %1389 = vst [vmem:[#allocation2 + $0x90] sm:$0xf] %v1261
    %1390 = vst [vmem:[#allocation2 + $0x94] sm:$0xf] %v1262
    %1391 = vst [vmem:[#allocation2 + $0x98] sm:$0xf] %v1263
    %1392 = vst [vmem:[#allocation2 + $0x9c] sm:$0xf] %v1264
    %1393 = vst [vmem:[#allocation2 + $0xa0] sm:$0xf] %v1265
    %1394 = vst [vmem:[#allocation2 + $0xa4] sm:$0xf] %v1266
    %1395 = vst [vmem:[#allocation2 + $0xa8] sm:$0xf] %v1267
    %1396 = vst [vmem:[#allocation2 + $0xac] sm:$0xf] %v1268
    %1397 = vst [vmem:[#allocation2 + $0xb0] sm:$0xf] %v1269
    %1398 = vst [vmem:[#allocation2 + $0xb4] sm:$0xf] %v1270
    %1399 = vst [vmem:[#allocation2 + $0xb8] sm:$0xf] %v1271
    %1400 = vst [vmem:[#allocation2 + $0xbc] sm:$0xf] %v1272
    %1401 = vst [vmem:[#allocation2 + $0xc0] sm:$0xf] %v1273
    %1402 = vst [vmem:[#allocation2 + $0xc4] sm:$0xf] %v1274
    %1403 = vst [vmem:[#allocation2 + $0xc8] sm:$0xf] %v1275
    %1404 = vst [vmem:[#allocation2 + $0xcc] sm:$0xf] %v1276
    %1405 = vst [vmem:[#allocation2 + $0xd0] sm:$0xf] %v1277
    %1406 = vst [vmem:[#allocation2 + $0xd4] sm:$0xf] %v1278
    %1407 = vst [vmem:[#allocation2 + $0xd8] sm:$0xf] %v1279
    %1408 = vst [vmem:[#allocation2 + $0xdc] sm:$0xf] %v1280
    %1409 = vst [vmem:[#allocation2 + $0xe0] sm:$0xf] %v1281
    %1410 = vst [vmem:[#allocation2 + $0xe4] sm:$0xf] %v1282
    %1411 = vst [vmem:[#allocation2 + $0xe8] sm:$0xf] %v1283
    %1412 = vst [vmem:[#allocation2 + $0xec] sm:$0xf] %v1284
    %1413 = vst [vmem:[#allocation2 + $0xf0] sm:$0xf] %v1285
    %1414 = vst [vmem:[#allocation2 + $0xf4] sm:$0xf] %v1286
    %1415 = vst [vmem:[#allocation2 + $0xf8] sm:$0xf] %v1287
    %1416 = vst [vmem:[#allocation2 + $0xfc] sm:$0xf] %v1288
    // Predicated region
    $region14: #{tpu_custom_call.1} parent=1 // pred_check
      _
    $region15: #{tpu_custom_call.1} parent=1 // pred_check_branch
      %1418 = sbr.rel (0) target = $region17
    $region16: #{tpu_custom_call.1} parent=1 // pred_region
      %s1420 = ssub.s32 4096, 4096
      %1421 = vsyncadd [#allocation3], %s1420
      %s1422 = sshll.u32 [#allocation2], 4
      %s1423 = int_to_ptr.vmem [resolvable:$true] %s1422
      %1428 = dma.vmem_to_hbm [thread:$0]  %s1423, 4096, %s3, [#allocation3], 64, 64, 4
    $region17: #{tpu_custom_call.1} parent=1 // pred_fallthru
      _
    // Predicated region
    $region18: #{tpu_custom_call.1} parent=1 // pred_check
      _
    $region19: #{tpu_custom_call.1} parent=1 // pred_check_branch
      %1430 = sbr.rel (0) target = $region21
    $region20: #{tpu_custom_call.1} parent=1 // pred_region
      %1431 = dma.done [#allocation3], 4096
    $region21: #{tpu_custom_call.1} parent=1 // pred_fallthru
      _
    %1432 = vsyncpa [#allocation3], 1

</llo_original>
